<compile_context>
chip_gen: v7x
topology: tpu7x:2x2x1
jax: 0.10.0
libtpu: 0.0.40
codegen_flags: <defaults>
</compile_context>

<pallas_src>
import jax
import jax.numpy as jnp
from jax.experimental import pallas as pl
from jax.experimental.pallas import tpu as pltpu

EPS = 1e-5
VMEM_LIMIT = 32 * 1024 * 1024  # explicit scoped-VMEM cap (>= defaults everywhere)


# -----------------------------------------------------------------------------
# Kernel 1: 3x3 conv (stride 1, 'same') as a single im2col matmul
#           + folded BatchNorm + PReLU
# -----------------------------------------------------------------------------
def conv_bn_prelu_kernel(p_ref, w_ref, scale_ref, bias_ref, alpha_ref, o_ref):
    # p_ref: (1, H*W, Kpad)  w_ref: (Kpad, Cout)
    # scale/bias/alpha: (1, Cout)  o_ref: (1, H*W, Cout)
    acc = jnp.dot(p_ref[0], w_ref[...], preferred_element_type=jnp.float32)
    y = acc * scale_ref[...] + bias_ref[...]           # BatchNorm folded to scale/bias
    y = jnp.where(y >= 0.0, y, alpha_ref[...] * y)     # PReLU, per-channel alpha
    o_ref[...] = y[None].astype(o_ref.dtype)


def _im2col_3x3(x_nhwc):
    # (N,H,W,C) -> (N, H*W, 9*C) with (ky, kx, cin) ordering on the last axis.
    N, H, W, C = x_nhwc.shape
    xp = jnp.pad(x_nhwc, ((0, 0), (1, 1), (1, 1), (0, 0)))
    taps = [xp[:, ky:ky + H, kx:kx + W, :] for ky in range(3) for kx in range(3)]
    patches = jnp.stack(taps, axis=3)                  # (N, H, W, 9, C)
    return patches.reshape(N, H * W, 9 * C)


def conv3x3_bn_prelu(x_nhwc, w_hwio, scale, bias, alpha):
    N, H, W, Cin = x_nhwc.shape
    Cout = w_hwio.shape[-1]
    HW = H * W
    K = 9 * Cin
    Kpad = ((K + 31) // 32) * 32                       # pad contraction dim 27 -> 32
    patches = _im2col_3x3(x_nhwc)                      # (N, HW, 9*Cin)
    patches = jnp.pad(patches, ((0, 0), (0, 0), (0, Kpad - K)))
    w2d = w_hwio.reshape(K, Cout)                      # (ky,kx,cin) major -> matches im2col
    w2d = jnp.pad(w2d, ((0, Kpad - K), (0, 0)))
    out = pl.pallas_call(
        conv_bn_prelu_kernel,
        out_shape=jax.ShapeDtypeStruct((N, HW, Cout), jnp.float32),
        grid_spec=pltpu.PrefetchScalarGridSpec(
            num_scalar_prefetch=0,
            grid=(N,),
            in_specs=[
                pl.BlockSpec((1, HW, Kpad), lambda n: (n, 0, 0)),
                pl.BlockSpec((Kpad, Cout), lambda n: (0, 0)),
                pl.BlockSpec((1, Cout), lambda n: (0, 0)),
                pl.BlockSpec((1, Cout), lambda n: (0, 0)),
                pl.BlockSpec((1, Cout), lambda n: (0, 0)),
            ],
            out_specs=pl.BlockSpec((1, HW, Cout), lambda n: (n, 0, 0)),
        ),
        compiler_params=pltpu.CompilerParams(dimension_semantics=("parallel",)),
    )(patches, w2d, scale, bias, alpha)
    return out.reshape(N, HW * Cout)                   # flatten in (H, W, C) order


# -----------------------------------------------------------------------------
# Kernel 2: feature fc (flatten -> 512) + bias + folded BatchNorm1d.
#           Grid = (output tiles, K tiles): output axis "parallel" (megacore split
#           of the 8.4 MB bf16 weight stream on v7x), K reduction last; f32
#           accumulation directly in the resident output block.
# -----------------------------------------------------------------------------
def fc_bn_kernel(x_ref, w_ref, b_ref, scale_ref, bias_ref, o_ref):
    k = pl.program_id(1)

    @pl.when(k == 0)
    def _():
        o_ref[...] = jnp.zeros_like(o_ref)

    o_ref[...] += jnp.dot(x_ref[...], w_ref[...],
                          preferred_element_type=jnp.float32)

    @pl.when(k == pl.num_programs(1) - 1)
    def _():
        o_ref[...] = (o_ref[...] + b_ref[...]) * scale_ref[...] + bias_ref[...]


def linear_bn(x, w, b, scale, bias, tk=4096, tn=256):
    M, K = x.shape
    _, Nout = w.shape
    assert K % tk == 0 and Nout % tn == 0
    return pl.pallas_call(
        fc_bn_kernel,
        out_shape=jax.ShapeDtypeStruct((M, Nout), jnp.float32),
        grid_spec=pltpu.PrefetchScalarGridSpec(
            num_scalar_prefetch=0,
            grid=(Nout // tn, K // tk),
            in_specs=[
                pl.BlockSpec((M, tk), lambda j, k: (0, k)),
                pl.BlockSpec((tk, tn), lambda j, k: (k, j)),
                pl.BlockSpec((1, tn), lambda j, k: (0, j)),
                pl.BlockSpec((1, tn), lambda j, k: (0, j)),
                pl.BlockSpec((1, tn), lambda j, k: (0, j)),
            ],
            out_specs=pl.BlockSpec((M, tn), lambda j, k: (0, j)),
        ),
        compiler_params=pltpu.CompilerParams(
            dimension_semantics=("parallel", "arbitrary"),
            vmem_limit_bytes=VMEM_LIMIT),
    )(x, w, b, scale, bias)


# -----------------------------------------------------------------------------
# Kernel 3: classifier fc (512 -> num_classes), N-tiled over the class dim.
#           bf16 weight streaming, lane-dense even tile count (4 x 2560),
#           default double-buffered weight pipeline.
# -----------------------------------------------------------------------------
def fc_kernel(x_ref, w_ref, b_ref, o_ref):
    o_ref[...] = (jnp.dot(x_ref[...], w_ref[...],
                          preferred_element_type=jnp.float32)
                  + b_ref[...]).astype(o_ref.dtype)


def linear(x, w, b, tn=2560):
    M, K = x.shape
    _, Nout = w.shape
    assert Nout % tn == 0
    return pl.pallas_call(
        fc_kernel,
        out_shape=jax.ShapeDtypeStruct((M, Nout), jnp.float32),
        grid_spec=pltpu.PrefetchScalarGridSpec(
            num_scalar_prefetch=0,
            grid=(Nout // tn,),
            in_specs=[
                pl.BlockSpec((M, K), lambda j: (0, 0)),
                pl.BlockSpec((K, tn), lambda j: (0, j)),
                pl.BlockSpec((1, tn), lambda j: (0, j)),
            ],
            out_specs=pl.BlockSpec((M, tn), lambda j: (0, j)),
        ),
        compiler_params=pltpu.CompilerParams(
            dimension_semantics=("parallel",),
            vmem_limit_bytes=VMEM_LIMIT),
    )(x, w, b)


# -----------------------------------------------------------------------------
# Parameter construction (deterministic, synthetic) and forward pass
# -----------------------------------------------------------------------------
def _fold_bn(key, ch):
    kg, kb, km, kv = jax.random.split(key, 4)
    gamma = 1.0 + 0.1 * jax.random.normal(kg, (ch,), jnp.float32)
    beta = 0.1 * jax.random.normal(kb, (ch,), jnp.float32)
    mean = 0.1 * jax.random.normal(km, (ch,), jnp.float32)
    var = jnp.abs(jax.random.normal(kv, (ch,), jnp.float32)) + 1.0
    scale = gamma / jnp.sqrt(var + EPS)
    bias = beta - mean * scale
    return scale.reshape(1, ch), bias.reshape(1, ch)


def init_face_model_params(key, in_ch=3, stem_ch=32, hw=16, emb=512,
                           num_classes=10177, class_tile=2560):
    ks = jax.random.split(key, 8)
    flat = hw * hw * stem_ch

    conv_w = 0.1 * jax.random.normal(ks[0], (3, 3, in_ch, stem_ch), jnp.float32)
    bn1_scale, bn1_bias = _fold_bn(ks[1], stem_ch)
    prelu_alpha = 0.25 * jnp.ones((1, stem_ch), jnp.float32)

    # Large FC weights stored as bf16 (HBM-bandwidth bound kernels); both the
    # Pallas path and the reference use the *same* bf16 weights.
    # TODO(synk): int8 (v5e/v6e) / fp8 (v7x) weight quantization would halve the
    # dominant ~19 MB weight stream but changes the accuracy contract.
    fc_feat_w = (jax.random.normal(ks[2], (flat, emb), jnp.float32)
                 / jnp.sqrt(flat)).astype(jnp.bfloat16)
    fc_feat_b = 0.01 * jax.random.normal(ks[3], (emb,), jnp.float32).reshape(1, emb)
    bn2_scale, bn2_bias = _fold_bn(ks[4], emb)

    # FaceModel.fc: Linear(512, num_classes)
    fc_out_w = jax.random.normal(ks[5], (emb, num_classes), jnp.float32) / jnp.sqrt(emb)
    fc_out_b = 0.01 * jax.random.normal(ks[6], (num_classes,), jnp.float32)

    # pad class dim to a multiple of the class tile (10177 -> 10240); sliced back after
    nc_pad = ((num_classes + class_tile - 1) // class_tile) * class_tile
    fc_out_w_p = jnp.pad(fc_out_w, ((0, 0), (0, nc_pad - num_classes))).astype(jnp.bfloat16)
    fc_out_b_p = jnp.pad(fc_out_b, (0, nc_pad - num_classes)).reshape(1, nc_pad)

    return dict(conv_w=conv_w, bn1_scale=bn1_scale, bn1_bias=bn1_bias,
                prelu_alpha=prelu_alpha,
                fc_feat_w=fc_feat_w, fc_feat_b=fc_feat_b,
                bn2_scale=bn2_scale, bn2_bias=bn2_bias,
                fc_out_w=fc_out_w_p, fc_out_b=fc_out_b_p,
                num_classes=num_classes, class_tile=class_tile)


def face_model_forward(params, images_nchw):
    # NCHW (PyTorch convention) -> NHWC for the kernels
    x = jnp.transpose(images_nchw, (0, 2, 3, 1)).astype(jnp.float32)
    h = conv3x3_bn_prelu(x, params["conv_w"], params["bn1_scale"],
                         params["bn1_bias"], params["prelu_alpha"])  # (N, H*W*C) f32
    # Single activation cast (kernels run bf16 x bf16 -> f32 accumulation)
    feat = linear_bn(h.astype(jnp.bfloat16), params["fc_feat_w"],
                     params["fc_feat_b"], params["bn2_scale"],
                     params["bn2_bias"])                             # 512-d embedding, f32
    logits = linear(feat.astype(jnp.bfloat16), params["fc_out_w"],
                    params["fc_out_b"], tn=params["class_tile"])
    return logits[:, :params["num_classes"]]


def face_model_reference(params, images_nchw):
    hi = jax.lax.Precision.HIGHEST
    x = jnp.transpose(images_nchw, (0, 2, 3, 1)).astype(jnp.float32)
    y = jax.lax.conv_general_dilated(
        x, params["conv_w"], (1, 1), "SAME",
        dimension_numbers=("NHWC", "HWIO", "NHWC"), precision=hi)
    y = y * params["bn1_scale"].reshape(1, 1, 1, -1) + params["bn1_bias"].reshape(1, 1, 1, -1)
    y = jnp.where(y >= 0, y, params["prelu_alpha"].reshape(1, 1, 1, -1) * y)
    h = y.reshape(y.shape[0], -1)
    f = jnp.dot(h, params["fc_feat_w"].astype(jnp.float32), precision=hi) + params["fc_feat_b"]
    f = f * params["bn2_scale"] + params["bn2_bias"]
    out = jnp.dot(f, params["fc_out_w"].astype(jnp.float32), precision=hi) + params["fc_out_b"]
    return out[:, :params["num_classes"]]


if __name__ == "__main__":
    key = jax.random.PRNGKey(0)
    k_img, k_par = jax.random.split(key)

    # small shapes: batch=2, channels=3 (RGB faces), spatial=16, num_classes=10177
    # (raising batch to 128-256 is essentially free throughput: both FC kernels are
    #  weight-streaming bound at M=2)
    B, C, HW = 2, 3, 16
    NUM_CLASSES = 10177
    images = jax.random.normal(k_img, (B, C, HW, HW), jnp.float32)

    params = init_face_model_params(k_par, in_ch=C, stem_ch=32, hw=HW,
                                    emb=512, num_classes=NUM_CLASSES)

    logits = face_model_forward(params, images)
    logits = jax.block_until_ready(logits)

    assert logits.shape == (B, NUM_CLASSES), logits.shape
    ref = face_model_reference(params, images)
    assert bool(jnp.all(jnp.isfinite(logits)))
    # 2e-2 tolerance: kernels use bf16 activations x bf16 weights (f32 accum) for the
    # two large FCs, reference uses f32 activations x f32-upcast weights.
    assert bool(jnp.allclose(logits, ref, rtol=2e-2, atol=2e-2)), \
        float(jnp.max(jnp.abs(logits - ref)))

    print("KERNEL_OK")
</pallas_src>

<mosaic_0001>
module attributes {stable_mosaic.version = 11 : i64} {
  func.func @conv_bn_prelu_kernel(%arg0: i32, %arg1: memref<1x256x32xf32, #tpu.memory_space<vmem>>, %arg2: memref<32x32xf32, #tpu.memory_space<vmem>>, %arg3: memref<1x32xf32, #tpu.memory_space<vmem>>, %arg4: memref<1x32xf32, #tpu.memory_space<vmem>>, %arg5: memref<1x32xf32, #tpu.memory_space<vmem>>, %arg6: memref<1x256x32xf32, #tpu.memory_space<vmem>>) attributes {dimension_semantics = [#tpu.dimension_semantics<parallel>], iteration_bounds = array<i64: 2>, scalar_prefetch = 0 : i64, scratch_operands = 0 : i64, tpu.core_type = #tpu.core_type<tc>, window_params = [{transform_indices = @transform_0, window_bounds = array<i64: 1, 256, 32>}, {pipeline_mode = #tpu.pipeline_mode<synchronous>, transform_indices = @transform_1, window_bounds = array<i64: 32, 32>}, {pipeline_mode = #tpu.pipeline_mode<synchronous>, transform_indices = @transform_2, window_bounds = array<i64: 1, 32>}, {pipeline_mode = #tpu.pipeline_mode<synchronous>, transform_indices = @transform_3, window_bounds = array<i64: 1, 32>}, {pipeline_mode = #tpu.pipeline_mode<synchronous>, transform_indices = @transform_4, window_bounds = array<i64: 1, 32>}, {transform_indices = @transform_5, window_bounds = array<i64: 1, 256, 32>}]} {
    %c0 = arith.constant 0 : index
    %c0_0 = arith.constant 0 : index
    %c0_1 = arith.constant 0 : index
    %0 = vector.load %arg1[%c0, %c0_0, %c0_1] : memref<1x256x32xf32, #tpu.memory_space<vmem>>, vector<1x256x32xf32>
    %1 = vector.shape_cast %0 : vector<1x256x32xf32> to vector<256x32xf32>
    %c0_2 = arith.constant 0 : index
    %c0_3 = arith.constant 0 : index
    %2 = vector.load %arg2[%c0_2, %c0_3] : memref<32x32xf32, #tpu.memory_space<vmem>>, vector<32x32xf32>
    %cst = arith.constant dense<0.000000e+00> : vector<256x32xf32>
    %3 = tpu.matmul %1, %2, %cst {dimension_numbers = #tpu.dot_dimension_numbers<[1], [0], [0], [1], [0, 0, 1, 1], [], []>} : vector<256x32xf32>, vector<32x32xf32>, vector<256x32xf32> -> vector<256x32xf32>
    %c0_4 = arith.constant 0 : index
    %c0_5 = arith.constant 0 : index
    %4 = vector.load %arg3[%c0_4, %c0_5] : memref<1x32xf32, #tpu.memory_space<vmem>>, vector<1x32xf32>
    %5 = vector.broadcast %4 : vector<1x32xf32> to vector<256x32xf32>
    %6 = arith.mulf %3, %5 : vector<256x32xf32>
    %c0_6 = arith.constant 0 : index
    %c0_7 = arith.constant 0 : index
    %7 = vector.load %arg4[%c0_6, %c0_7] : memref<1x32xf32, #tpu.memory_space<vmem>>, vector<1x32xf32>
    %8 = vector.broadcast %7 : vector<1x32xf32> to vector<256x32xf32>
    %9 = arith.addf %6, %8 : vector<256x32xf32>
    %cst_8 = arith.constant 0.000000e+00 : f32
    %10 = vector.broadcast %cst_8 : f32 to vector<256x32xf32>
    %11 = arith.cmpf oge, %9, %10 : vector<256x32xf32>
    %c0_9 = arith.constant 0 : index
    %c0_10 = arith.constant 0 : index
    %12 = vector.load %arg5[%c0_9, %c0_10] : memref<1x32xf32, #tpu.memory_space<vmem>>, vector<1x32xf32>
    %13 = vector.broadcast %12 : vector<1x32xf32> to vector<256x32xf32>
    %14 = arith.mulf %13, %9 : vector<256x32xf32>
    %15 = arith.select %11, %9, %14 : vector<256x32xi1>, vector<256x32xf32>
    %16 = vector.shape_cast %15 : vector<256x32xf32> to vector<1x256x32xf32>
    %c0_11 = arith.constant 0 : index
    %c0_12 = arith.constant 0 : index
    %c0_13 = arith.constant 0 : index
    %17 = vector.load %arg6[%c0_11, %c0_12, %c0_13] : memref<1x256x32xf32, #tpu.memory_space<vmem>>, vector<1x256x32xf32>
    tpu.vector_store %arg6[%c0_11, %c0_12, %c0_13], %16 {strides = array<i32>} : memref<1x256x32xf32, #tpu.memory_space<vmem>>, vector<1x256x32xf32>,
    return
  }
  func.func @transform_0(%arg0: i32) -> (i32, i32, i32) {
    %c0_i32 = arith.constant 0 : i32
    %c0_i32_0 = arith.constant 0 : i32
    %c0_i32_1 = arith.constant 0 : i32
    return %arg0, %c0_i32, %c0_i32_0 : i32, i32, i32
  }
  func.func @transform_1(%arg0: i32) -> (i32, i32) {
    %c0_i32 = arith.constant 0 : i32
    %c0_i32_0 = arith.constant 0 : i32
    %c0_i32_1 = arith.constant 0 : i32
    return %c0_i32, %c0_i32_0 : i32, i32
  }
  func.func @transform_2(%arg0: i32) -> (i32, i32) {
    %c0_i32 = arith.constant 0 : i32
    %c0_i32_0 = arith.constant 0 : i32
    %c0_i32_1 = arith.constant 0 : i32
    return %c0_i32, %c0_i32_0 : i32, i32
  }
  func.func @transform_3(%arg0: i32) -> (i32, i32) {
    %c0_i32 = arith.constant 0 : i32
    %c0_i32_0 = arith.constant 0 : i32
    %c0_i32_1 = arith.constant 0 : i32
    return %c0_i32, %c0_i32_0 : i32, i32
  }
  func.func @transform_4(%arg0: i32) -> (i32, i32) {
    %c0_i32 = arith.constant 0 : i32
    %c0_i32_0 = arith.constant 0 : i32
    %c0_i32_1 = arith.constant 0 : i32
    return %c0_i32, %c0_i32_0 : i32, i32
  }
  func.func @transform_5(%arg0: i32) -> (i32, i32, i32) {
    %c0_i32 = arith.constant 0 : i32
    %c0_i32_0 = arith.constant 0 : i32
    %c0_i32_1 = arith.constant 0 : i32
    return %arg0, %c0_i32, %c0_i32_0 : i32, i32, i32
  }
}

</mosaic_0001>

<llo_original>
// kernel: tpu_custom_call.1
$region0: #{tpu_custom_call.1}
  #allocation0 [shape = 'u32[]', space=smem, size = 0x4, offset = 0x4, fixed_abs, tag = 'smem constant byte address 0x4 - core index']
  #allocation1 [shape = 'u32[144,128]{1,0:T(1,128)}', space=vmem, size = 0x12000, scoped, tag = 'internal scratch']
  %s0 = inlined_call_operand.vmem [shape: f32[2,256,32], index: 0, kind: input, shape index: {}]
  %s1 = inlined_call_operand.vmem [shape: f32[32,32], index: 1, kind: input, shape index: {}]
  %s2 = inlined_call_operand.vmem [shape: f32[1,32], index: 2, kind: input, shape index: {}]
  %s3 = inlined_call_operand.vmem [shape: f32[1,32], index: 3, kind: input, shape index: {}]
  %s4 = inlined_call_operand.vmem [shape: f32[1,32], index: 4, kind: input, shape index: {}]
  %s5 = inlined_call_operand.vmem [shape: f32[2,256,32], index: 5, kind: output, shape index: {}]
  %s6 = sld [smem:[#allocation0]]
  $region53: #{tpu_custom_call.1} parent=0
    _
  %s8 = ssub.s32 1, %s6
  %s9 = scalar_select 0, %s8, %s6
  loop: start=0, step=1, limit=4
  $region2: #{tpu_custom_call.1} parent=0 // loop_pre_header
    _
  $region3: #{tpu_custom_call.1} parent=0 // loop_header
    %s11 = sphi 0, %s15
    %p12 = scmp.ge.s32.totalorder %s11, 4
    %s21 = sphi 0, %s23
    %s24 = sphi 0, %s21
    %s25 = sphi 0, %s24
    %s41 = sphi 0, %s25
    %s45 = sphi 0, %s45
    %s47 = sphi 0, %s45
    %s48 = sphi 0, %s47
    %s62 = sphi 0, %s48
    %s66 = sphi 0, %s66
    %s68 = sphi 0, %s66
    %s69 = sphi 0, %s68
    %s83 = sphi 0, %s69
    %s87 = sphi 0, %s87
    %s89 = sphi 0, %s87
    %s90 = sphi 0, %s89
    %s104 = sphi 0, %s90
    %s108 = sphi 0, %s108
    %s110 = sphi 0, %s108
    %s111 = sphi 0, %s110
    %s125 = sphi 0, %s111
    %s131 = sphi 0, %s133
    %s134 = sphi 0, %s131
    %s135 = sphi 0, %s134
    %s151 = sphi 0, %s135
  $region4: #{tpu_custom_call.1} parent=0 // loop_header_branch
    %14 = sbr.rel (%p12) target = $region8
  $region5: #{tpu_custom_call.1} parent=0 // loop_body
    %s16 = ssub.s32 %s11, 1
    %s17 = ssub.s32 %s11, 2
    %s18 = sadd.s32 %s11, 1
    %s19 = ssub.s32 %s11, %s18
    %p20 = scmp.eq.s32.totalorder %s19, 0
    %s22 = sadd.s32 %s21, 1
    %s23 = scalar_select %p20, %s21, %s22
    %p26 = pneg %p20
    %p27 = scmp.eq.s32.totalorder %s11, 1
    %p28 = por %p26, %p27
    %p29 = scmp.ne.s32.totalorder %s21, %s24
    %p30 = scmp.eq.s32.totalorder %s11, 0
    %p31 = por %p29, %p30
    %p32 = scmp.ne.s32.totalorder %s21, %s24
    %p33 = scmp.eq.s32.totalorder %s16, 1
    %p34 = por %p32, %p33
    %p35 = scmp.ne.s32.totalorder %s24, %s25
    %p36 = scmp.eq.s32.totalorder %s16, 0
    %p37 = por %p35, %p36
    %p38 = scmp.ne.s32.totalorder %s24, %s25
    %p39 = scmp.eq.s32.totalorder %s17, 1
    %p40 = por %p38, %p39
    %p42 = scmp.ne.s32.totalorder %s25, %s41
    %p43 = scmp.eq.s32.totalorder %s17, 0
    %p44 = por %p42, %p43
    %s46 = sadd.s32 %s45, 1
    %p49 = scmp.eq.s32.totalorder %s11, 1
    %p50 = scmp.ne.s32.totalorder %s45, %s47
    %p51 = scmp.eq.s32.totalorder %s11, 0
    %p52 = por %p50, %p51
    %p53 = scmp.ne.s32.totalorder %s45, %s47
    %p54 = scmp.eq.s32.totalorder %s16, 1
    %p55 = por %p53, %p54
    %p56 = scmp.ne.s32.totalorder %s47, %s48
    %p57 = scmp.eq.s32.totalorder %s16, 0
    %p58 = por %p56, %p57
    %p59 = scmp.ne.s32.totalorder %s47, %s48
    %p60 = scmp.eq.s32.totalorder %s17, 1
    %p61 = por %p59, %p60
    %p63 = scmp.ne.s32.totalorder %s48, %s62
    %p64 = scmp.eq.s32.totalorder %s17, 0
    %p65 = por %p63, %p64
    %s67 = sadd.s32 %s66, 1
    %p70 = scmp.eq.s32.totalorder %s11, 1
    %p71 = scmp.ne.s32.totalorder %s66, %s68
    %p72 = scmp.eq.s32.totalorder %s11, 0
    %p73 = por %p71, %p72
    %p74 = scmp.ne.s32.totalorder %s66, %s68
    %p75 = scmp.eq.s32.totalorder %s16, 1
    %p76 = por %p74, %p75
    %p77 = scmp.ne.s32.totalorder %s68, %s69
    %p78 = scmp.eq.s32.totalorder %s16, 0
    %p79 = por %p77, %p78
    %p80 = scmp.ne.s32.totalorder %s68, %s69
    %p81 = scmp.eq.s32.totalorder %s17, 1
    %p82 = por %p80, %p81
    %p84 = scmp.ne.s32.totalorder %s69, %s83
    %p85 = scmp.eq.s32.totalorder %s17, 0
    %p86 = por %p84, %p85
    %s88 = sadd.s32 %s87, 1
    %p91 = scmp.eq.s32.totalorder %s11, 1
    %p92 = scmp.ne.s32.totalorder %s87, %s89
    %p93 = scmp.eq.s32.totalorder %s11, 0
    %p94 = por %p92, %p93
    %p95 = scmp.ne.s32.totalorder %s87, %s89
    %p96 = scmp.eq.s32.totalorder %s16, 1
    %p97 = por %p95, %p96
    %p98 = scmp.ne.s32.totalorder %s89, %s90
    %p99 = scmp.eq.s32.totalorder %s16, 0
    %p100 = por %p98, %p99
    %p101 = scmp.ne.s32.totalorder %s89, %s90
    %p102 = scmp.eq.s32.totalorder %s17, 1
    %p103 = por %p101, %p102
    %p105 = scmp.ne.s32.totalorder %s90, %s104
    %p106 = scmp.eq.s32.totalorder %s17, 0
    %p107 = por %p105, %p106
    %s109 = sadd.s32 %s108, 1
    %p112 = scmp.eq.s32.totalorder %s11, 1
    %p113 = scmp.ne.s32.totalorder %s108, %s110
    %p114 = scmp.eq.s32.totalorder %s11, 0
    %p115 = por %p113, %p114
    %p116 = scmp.ne.s32.totalorder %s108, %s110
    %p117 = scmp.eq.s32.totalorder %s16, 1
    %p118 = por %p116, %p117
    %p119 = scmp.ne.s32.totalorder %s110, %s111
    %p120 = scmp.eq.s32.totalorder %s16, 0
    %p121 = por %p119, %p120
    %p122 = scmp.ne.s32.totalorder %s110, %s111
    %p123 = scmp.eq.s32.totalorder %s17, 1
    %p124 = por %p122, %p123
    %p126 = scmp.ne.s32.totalorder %s111, %s125
    %p127 = scmp.eq.s32.totalorder %s17, 0
    %p128 = por %p126, %p127
    %s129 = ssub.s32 %s11, %s18
    %p130 = scmp.eq.s32.totalorder %s129, 0
    %s132 = sadd.s32 %s131, 1
    %s133 = scalar_select %p130, %s131, %s132
    %p136 = pneg %p130
    %p137 = scmp.eq.s32.totalorder %s11, 1
    %p138 = por %p136, %p137
    %p139 = scmp.ne.s32.totalorder %s131, %s134
    %p140 = scmp.eq.s32.totalorder %s11, 0
    %p141 = por %p139, %p140
    %p142 = scmp.ne.s32.totalorder %s131, %s134
    %p143 = scmp.eq.s32.totalorder %s16, 1
    %p144 = por %p142, %p143
    %p145 = scmp.ne.s32.totalorder %s134, %s135
    %p146 = scmp.eq.s32.totalorder %s16, 0
    %p147 = por %p145, %p146
    %p148 = scmp.ne.s32.totalorder %s134, %s135
    %p149 = scmp.eq.s32.totalorder %s17, 1
    %p150 = por %p148, %p149
    %p152 = scmp.ne.s32.totalorder %s135, %s151
    %p153 = scmp.eq.s32.totalorder %s17, 0
    %p154 = por %p152, %p153
    %p155 = scmp.le.s32.totalorder 1, %s11
    %p156 = scmp.lt.s32.totalorder %s11, 3
    %p157 = pnand %p155, %p156
    %p158 = pneg %p157
    // Predicated region
    $region9: #{tpu_custom_call.1} parent=5 // pred_check
      _
    $region10: #{tpu_custom_call.1} parent=5 // pred_check_branch
      %160 = sbr.rel (%p157) target = $region12
    $region11: #{tpu_custom_call.1} parent=5 // pred_region
      %s161 = ssub.s32 %s11, 1
      // Predicated region
      $region13: #{tpu_custom_call.1} parent=11 // pred_check
        %p162 = pneg %p58
      $region14: #{tpu_custom_call.1} parent=11 // pred_check_branch
        %164 = sbr.rel (%p162) target = $region16
      $region15: #{tpu_custom_call.1} parent=11 // pred_region
        _
      $region16: #{tpu_custom_call.1} parent=11 // pred_fallthru
        _
      // Predicated region
      $region17: #{tpu_custom_call.1} parent=11 // pred_check
        %p165 = pneg %p79
      $region18: #{tpu_custom_call.1} parent=11 // pred_check_branch
        %167 = sbr.rel (%p165) target = $region20
      $region19: #{tpu_custom_call.1} parent=11 // pred_region
        _
      $region20: #{tpu_custom_call.1} parent=11 // pred_fallthru
        _
      // Predicated region
      $region21: #{tpu_custom_call.1} parent=11 // pred_check
        %p168 = pneg %p100
      $region22: #{tpu_custom_call.1} parent=11 // pred_check_branch
        %170 = sbr.rel (%p168) target = $region24
      $region23: #{tpu_custom_call.1} parent=11 // pred_region
        _
      $region24: #{tpu_custom_call.1} parent=11 // pred_fallthru
        _
      // Predicated region
      $region25: #{tpu_custom_call.1} parent=11 // pred_check
        %p171 = pneg %p121
      $region26: #{tpu_custom_call.1} parent=11 // pred_check_branch
        %173 = sbr.rel (%p171) target = $region28
      $region27: #{tpu_custom_call.1} parent=11 // pred_region
        _
      $region28: #{tpu_custom_call.1} parent=11 // pred_fallthru
        _
    $region12: #{tpu_custom_call.1} parent=5 // pred_fallthru
      _
    %p174 = scmp.lt.s32.totalorder %s11, 2
    // Predicated region
    $region29: #{tpu_custom_call.1} parent=5 // pred_check
      %p175 = pneg %p174
    $region30: #{tpu_custom_call.1} parent=5 // pred_check_branch
      %177 = sbr.rel (%p175) target = $region32
    $region31: #{tpu_custom_call.1} parent=5 // pred_region
      // Predicated region
      $region33: #{tpu_custom_call.1} parent=31 // pred_check
        %p178 = pneg %p31
      $region34: #{tpu_custom_call.1} parent=31 // pred_check_branch
        %180 = sbr.rel (%p178) target = $region36
      $region35: #{tpu_custom_call.1} parent=31 // pred_region
        %p181 = scmp.lt.s32.totalorder %s11, 1
        %s182 = scalar_select %p181, %s11, 1
        %s183 = smul.addr %s182, 32
        %s184 = smul.addr %s183, 8
        %s185 = scalar_lea.vmem %s0, %s184
      $region36: #{tpu_custom_call.1} parent=31 // pred_fallthru
        _
    $region32: #{tpu_custom_call.1} parent=5 // pred_fallthru
      _
    %p186 = scmp.le.s32.totalorder 1, %s11
    %p187 = scmp.lt.s32.totalorder %s11, 3
    %p188 = pnand %p186, %p187
    %p189 = pneg %p188
    // Predicated region
    $region37: #{tpu_custom_call.1} parent=5 // pred_check
      _
    $region38: #{tpu_custom_call.1} parent=5 // pred_check_branch
      %191 = sbr.rel (%p188) target = $region40
    $region39: #{tpu_custom_call.1} parent=5 // pred_region
      %s192 = ssub.s32 %s11, 1
      %p193 = scmp.lt.s32.totalorder %s16, 1
      %s194 = scalar_select %p193, %s16, 1
      %s195 = smul.addr %s194, 32
      %s196 = smul.addr %s195, 8
      %s197 = scalar_lea.vmem %s0, %s196
      %p198 = pneg %p37
      %p199 = pneg %p34
      %p200 = pneg %p58
      %p201 = pneg %p55
      %p202 = pneg %p79
      %p203 = pneg %p76
      %p204 = pneg %p100
      %p205 = pneg %p97
      %p206 = pneg %p121
      %p207 = pneg %p118
      %p208 = pneg %p147
      %p209 = pneg %p144
      %p210 = scmp.lt.s32.totalorder %s16, 1
      %s211 = scalar_select %p210, %s16, 1
      %s212 = smul.addr %s211, 32
      %s213 = smul.addr %s212, 8
      %s214 = scalar_lea.vmem %s5, %s213
      %p215 = scmp.lt.s32.totalorder %s16, 1
      %s216 = scalar_select %p215, %s16, 1
      %s217 = smul.addr %s216, 32
      %s218 = smul.addr %s217, 8
      %s219 = scalar_lea.vmem %s0, %s218
      %p220 = scmp.lt.s32.totalorder %s16, 1
      %s221 = scalar_select %p220, %s16, 1
      %s222 = smul.addr %s221, 32
      %s223 = smul.addr %s222, 8
      %s224 = scalar_lea.vmem %s5, %s223
      %v225 = vld [vmem:[%s219] sm:$0xff]
      %v226 = vld [vmem:[%s219 + $0x8] sm:$0xff]
      %v227 = vld [vmem:[%s219 + $0x10] sm:$0xff]
      %v228 = vld [vmem:[%s219 + $0x18] sm:$0xff]
      %v229 = vld [vmem:[%s219 + $0x20] sm:$0xff]
      %v230 = vld [vmem:[%s219 + $0x28] sm:$0xff]
      %v231 = vld [vmem:[%s219 + $0x30] sm:$0xff]
      %v232 = vld [vmem:[%s219 + $0x38] sm:$0xff]
      %v233 = vld [vmem:[%s219 + $0x40] sm:$0xff]
      %v234 = vld [vmem:[%s219 + $0x48] sm:$0xff]
      %v235 = vld [vmem:[%s219 + $0x50] sm:$0xff]
      %v236 = vld [vmem:[%s219 + $0x58] sm:$0xff]
      %v237 = vld [vmem:[%s219 + $0x60] sm:$0xff]
      %v238 = vld [vmem:[%s219 + $0x68] sm:$0xff]
      %v239 = vld [vmem:[%s219 + $0x70] sm:$0xff]
      %v240 = vld [vmem:[%s219 + $0x78] sm:$0xff]
      %v241 = vld [vmem:[%s219 + $0x80] sm:$0xff]
      %v242 = vld [vmem:[%s219 + $0x88] sm:$0xff]
      %v243 = vld [vmem:[%s219 + $0x90] sm:$0xff]
      %v244 = vld [vmem:[%s219 + $0x98] sm:$0xff]
      %v245 = vld [vmem:[%s219 + $0xa0] sm:$0xff]
      %v246 = vld [vmem:[%s219 + $0xa8] sm:$0xff]
      %v247 = vld [vmem:[%s219 + $0xb0] sm:$0xff]
      %v248 = vld [vmem:[%s219 + $0xb8] sm:$0xff]
      %v249 = vld [vmem:[%s219 + $0xc0] sm:$0xff]
      %v250 = vld [vmem:[%s219 + $0xc8] sm:$0xff]
      %v251 = vld [vmem:[%s219 + $0xd0] sm:$0xff]
      %v252 = vld [vmem:[%s219 + $0xd8] sm:$0xff]
      %v253 = vld [vmem:[%s219 + $0xe0] sm:$0xff]
      %v254 = vld [vmem:[%s219 + $0xe8] sm:$0xff]
      %v255 = vld [vmem:[%s219 + $0xf0] sm:$0xff]
      %v256 = vld [vmem:[%s219 + $0xf8] sm:$0xff]
      %v257 = vld [vmem:[%s1] sm:$0xff]
      %v258 = vld [vmem:[%s1 + $0x8] sm:$0xff]
      %v259 = vld [vmem:[%s1 + $0x10] sm:$0xff]
      %v260 = vld [vmem:[%s1 + $0x18] sm:$0xff]
      %vm261 = vcmask 261120
      %v263 = vsel %vm261, %v225, 0
      %v266 = vsel %vm261, %v226, 0
      %v269 = vsel %vm261, %v227, 0
      %v272 = vsel %vm261, %v228, 0
      %v275 = vsel %vm261, %v229, 0
      %v278 = vsel %vm261, %v230, 0
      %v281 = vsel %vm261, %v231, 0
      %v284 = vsel %vm261, %v232, 0
      %v287 = vsel %vm261, %v233, 0
      %v290 = vsel %vm261, %v234, 0
      %v293 = vsel %vm261, %v235, 0
      %v296 = vsel %vm261, %v236, 0
      %v299 = vsel %vm261, %v237, 0
      %v302 = vsel %vm261, %v238, 0
      %v305 = vsel %vm261, %v239, 0
      %v308 = vsel %vm261, %v240, 0
      %v311 = vsel %vm261, %v241, 0
      %v314 = vsel %vm261, %v242, 0
      %v317 = vsel %vm261, %v243, 0
      %v320 = vsel %vm261, %v244, 0
      %v323 = vsel %vm261, %v245, 0
      %v326 = vsel %vm261, %v246, 0
      %v329 = vsel %vm261, %v247, 0
      %v332 = vsel %vm261, %v248, 0
      %v335 = vsel %vm261, %v249, 0
      %v338 = vsel %vm261, %v250, 0
      %v341 = vsel %vm261, %v251, 0
      %v344 = vsel %vm261, %v252, 0
      %v347 = vsel %vm261, %v253, 0
      %v350 = vsel %vm261, %v254, 0
      %v353 = vsel %vm261, %v255, 0
      %v356 = vsel %vm261, %v256, 0
      %358 = vmatprep.subr.mxu0 0.0
      %359 = vmatpush1.msra.mxu0 %v257
      %360 = vmatprep.subr.mxu0 0.0
      %361 = vmatpush1.msra.mxu0 %v258
      %362 = vmatprep.subr.mxu0 0.0
      %363 = vmatpush1.msra.mxu0 %v259
      %364 = vmatprep.subr.mxu0 0.0
      %365 = vmatpush1.msra.mxu0 %v260
      %366 = vmatprep.subr.mxu0 0.0
      %367 = vmatpush1.msra.mxu0 0.0
      %368 = vmatprep.subr.mxu0 0.0
      %369 = vmatpush1.msra.mxu0 0.0
      %370 = vmatprep.subr.mxu0 0.0
      %371 = vmatpush1.msra.mxu0 0.0
      %372 = vmatprep.subr.mxu0 0.0
      %373 = vmatpush1.msra.mxu0 0.0
      %374 = vmatprep.subr.mxu0 0.0
      %375 = vmatpush1.msra.mxu0 0.0
      %376 = vmatprep.subr.mxu0 0.0
      %377 = vmatpush1.msra.mxu0 0.0
      %378 = vmatprep.subr.mxu0 0.0
      %379 = vmatpush1.msra.mxu0 0.0
      %380 = vmatprep.subr.mxu0 0.0
      %381 = vmatpush1.msra.mxu0 0.0
      %382 = vmatprep.subr.mxu0 0.0
      %383 = vmatpush1.msra.mxu0 0.0
      %384 = vmatprep.subr.mxu0 0.0
      %385 = vmatpush1.msra.mxu0 0.0
      %386 = vmatprep.subr.mxu0 0.0
      %387 = vmatpush1.msra.mxu0 0.0
      %388 = vmatprep.subr.mxu0 0.0
      %389 = vmatpush1.msra.mxu0 0.0
      %390 = vmatprep.subr.mxu0 0.0
      %391 = vmatpush1.msra.mxu0 0.0
      %392 = vmatprep.subr.mxu0 0.0
      %393 = vmatpush1.msra.mxu0 0.0
      %394 = vmatprep.subr.mxu0 0.0
      %395 = vmatpush1.msra.mxu0 0.0
      %396 = vmatprep.subr.mxu0 0.0
      %397 = vmatpush1.msra.mxu0 0.0
      %398 = vmatprep.subr.mxu0 0.0
      %399 = vmatpush1.msra.mxu0 0.0
      %400 = vmatprep.subr.mxu0 0.0
      %401 = vmatpush1.msra.mxu0 0.0
      %402 = vmatprep.subr.mxu0 0.0
      %403 = vmatpush1.msra.mxu0 0.0
      %404 = vmatprep.subr.mxu0 0.0
      %405 = vmatpush1.msra.mxu0 0.0
      %406 = vmatprep.subr.mxu0 0.0
      %407 = vmatpush1.msra.mxu0 0.0
      %408 = vmatprep.subr.mxu0 0.0
      %409 = vmatpush1.msra.mxu0 0.0
      %410 = vmatprep.subr.mxu0 0.0
      %411 = vmatpush1.msra.mxu0 0.0
      %412 = vmatprep.subr.mxu0 0.0
      %413 = vmatpush1.msra.mxu0 0.0
      %414 = vmatprep.subr.mxu0 0.0
      %415 = vmatpush1.msra.mxu0 0.0
      %416 = vmatprep.subr.mxu0 0.0
      %417 = vmatpush1.msra.mxu0 0.0
      %418 = vmatprep.subr.mxu0 0.0
      %419 = vmatpush1.msra.mxu0 0.0
      %420 = vmatprep.subr.mxu0 0.0
      %421 = vmatpush1.msra.mxu0 0.0
      %422 = vmatprep.mubr.f32.mxu0 0.0
      %423 = vmatmul.mubr.f32.gmra.mrb[0].mxu0 %v263
      %v424 = vpop.f32.mrb[0].mxu0
      %v425 = vadd.f32 0.0, %v424
      %v426 = vpop.f32.mrb[0].mxu0
      %427 = vmatprep.mubr.f32.mxu0 0.0
      %428 = vmatmul.mubr.f32.gmra.mrb[0].mxu0 %v266
      %v429 = vpop.f32.mrb[0].mxu0
      %v430 = vadd.f32 0.0, %v429
      %v431 = vpop.f32.mrb[0].mxu0
      %432 = vmatprep.mubr.f32.mxu0 0.0
      %433 = vmatmul.mubr.f32.gmra.mrb[0].mxu0 %v269
      %v434 = vpop.f32.mrb[0].mxu0
      %v435 = vadd.f32 0.0, %v434
      %v436 = vpop.f32.mrb[0].mxu0
      %437 = vmatprep.mubr.f32.mxu0 0.0
      %438 = vmatmul.mubr.f32.gmra.mrb[0].mxu0 %v272
      %v439 = vpop.f32.mrb[0].mxu0
      %v440 = vadd.f32 0.0, %v439
      %v441 = vpop.f32.mrb[0].mxu0
      %442 = vmatprep.mubr.f32.mxu0 0.0
      %443 = vmatmul.mubr.f32.gmra.mrb[0].mxu0 %v275
      %v444 = vpop.f32.mrb[0].mxu0
      %v445 = vadd.f32 0.0, %v444
      %v446 = vpop.f32.mrb[0].mxu0
      %447 = vmatprep.mubr.f32.mxu0 0.0
      %448 = vmatmul.mubr.f32.gmra.mrb[0].mxu0 %v278
      %v449 = vpop.f32.mrb[0].mxu0
      %v450 = vadd.f32 0.0, %v449
      %v451 = vpop.f32.mrb[0].mxu0
      %452 = vmatprep.mubr.f32.mxu0 0.0
      %453 = vmatmul.mubr.f32.gmra.mrb[0].mxu0 %v281
      %v454 = vpop.f32.mrb[0].mxu0
      %v455 = vadd.f32 0.0, %v454
      %v456 = vpop.f32.mrb[0].mxu0
      %457 = vmatprep.mubr.f32.mxu0 0.0
      %458 = vmatmul.mubr.f32.gmra.mrb[0].mxu0 %v284
      %v459 = vpop.f32.mrb[0].mxu0
      %v460 = vadd.f32 0.0, %v459
      %v461 = vpop.f32.mrb[0].mxu0
      %462 = vmatprep.mubr.f32.mxu0 0.0
      %463 = vmatmul.mubr.f32.gmra.mrb[0].mxu0 %v287
      %v464 = vpop.f32.mrb[0].mxu0
      %v465 = vadd.f32 0.0, %v464
      %v466 = vpop.f32.mrb[0].mxu0
      %467 = vmatprep.mubr.f32.mxu0 0.0
      %468 = vmatmul.mubr.f32.gmra.mrb[0].mxu0 %v290
      %v469 = vpop.f32.mrb[0].mxu0
      %v470 = vadd.f32 0.0, %v469
      %v471 = vpop.f32.mrb[0].mxu0
      %472 = vmatprep.mubr.f32.mxu0 0.0
      %473 = vmatmul.mubr.f32.gmra.mrb[0].mxu0 %v293
      %v474 = vpop.f32.mrb[0].mxu0
      %v475 = vadd.f32 0.0, %v474
      %v476 = vpop.f32.mrb[0].mxu0
      %477 = vmatprep.mubr.f32.mxu0 0.0
      %478 = vmatmul.mubr.f32.gmra.mrb[0].mxu0 %v296
      %v479 = vpop.f32.mrb[0].mxu0
      %v480 = vadd.f32 0.0, %v479
      %v481 = vpop.f32.mrb[0].mxu0
      %482 = vmatprep.mubr.f32.mxu0 0.0
      %483 = vmatmul.mubr.f32.gmra.mrb[0].mxu0 %v299
      %v484 = vpop.f32.mrb[0].mxu0
      %v485 = vadd.f32 0.0, %v484
      %v486 = vpop.f32.mrb[0].mxu0
      %487 = vmatprep.mubr.f32.mxu0 0.0
      %488 = vmatmul.mubr.f32.gmra.mrb[0].mxu0 %v302
      %v489 = vpop.f32.mrb[0].mxu0
      %v490 = vadd.f32 0.0, %v489
      %v491 = vpop.f32.mrb[0].mxu0
      %492 = vmatprep.mubr.f32.mxu0 0.0
      %493 = vmatmul.mubr.f32.gmra.mrb[0].mxu0 %v305
      %v494 = vpop.f32.mrb[0].mxu0
      %v495 = vadd.f32 0.0, %v494
      %v496 = vpop.f32.mrb[0].mxu0
      %497 = vmatprep.mubr.f32.mxu0 0.0
      %498 = vmatmul.mubr.f32.gmra.mrb[0].mxu0 %v308
      %v499 = vpop.f32.mrb[0].mxu0
      %v500 = vadd.f32 0.0, %v499
      %v501 = vpop.f32.mrb[0].mxu0
      %502 = vmatprep.mubr.f32.mxu0 0.0
      %503 = vmatmul.mubr.f32.gmra.mrb[0].mxu0 %v311
      %v504 = vpop.f32.mrb[0].mxu0
      %v505 = vadd.f32 0.0, %v504
      %v506 = vpop.f32.mrb[0].mxu0
      %507 = vmatprep.mubr.f32.mxu0 0.0
      %508 = vmatmul.mubr.f32.gmra.mrb[0].mxu0 %v314
      %v509 = vpop.f32.mrb[0].mxu0
      %v510 = vadd.f32 0.0, %v509
      %v511 = vpop.f32.mrb[0].mxu0
      %512 = vmatprep.mubr.f32.mxu0 0.0
      %513 = vmatmul.mubr.f32.gmra.mrb[0].mxu0 %v317
      %v514 = vpop.f32.mrb[0].mxu0
      %v515 = vadd.f32 0.0, %v514
      %v516 = vpop.f32.mrb[0].mxu0
      %517 = vmatprep.mubr.f32.mxu0 0.0
      %518 = vmatmul.mubr.f32.gmra.mrb[0].mxu0 %v320
      %v519 = vpop.f32.mrb[0].mxu0
      %v520 = vadd.f32 0.0, %v519
      %v521 = vpop.f32.mrb[0].mxu0
      %522 = vmatprep.mubr.f32.mxu0 0.0
      %523 = vmatmul.mubr.f32.gmra.mrb[0].mxu0 %v323
      %v524 = vpop.f32.mrb[0].mxu0
      %v525 = vadd.f32 0.0, %v524
      %v526 = vpop.f32.mrb[0].mxu0
      %527 = vmatprep.mubr.f32.mxu0 0.0
      %528 = vmatmul.mubr.f32.gmra.mrb[0].mxu0 %v326
      %v529 = vpop.f32.mrb[0].mxu0
      %v530 = vadd.f32 0.0, %v529
      %v531 = vpop.f32.mrb[0].mxu0
      %532 = vmatprep.mubr.f32.mxu0 0.0
      %533 = vmatmul.mubr.f32.gmra.mrb[0].mxu0 %v329
      %v534 = vpop.f32.mrb[0].mxu0
      %v535 = vadd.f32 0.0, %v534
      %v536 = vpop.f32.mrb[0].mxu0
      %537 = vmatprep.mubr.f32.mxu0 0.0
      %538 = vmatmul.mubr.f32.gmra.mrb[0].mxu0 %v332
      %v539 = vpop.f32.mrb[0].mxu0
      %v540 = vadd.f32 0.0, %v539
      %v541 = vpop.f32.mrb[0].mxu0
      %542 = vmatprep.mubr.f32.mxu0 0.0
      %543 = vmatmul.mubr.f32.gmra.mrb[0].mxu0 %v335
      %v544 = vpop.f32.mrb[0].mxu0
      %v545 = vadd.f32 0.0, %v544
      %v546 = vpop.f32.mrb[0].mxu0
      %547 = vmatprep.mubr.f32.mxu0 0.0
      %548 = vmatmul.mubr.f32.gmra.mrb[0].mxu0 %v338
      %v549 = vpop.f32.mrb[0].mxu0
      %v550 = vadd.f32 0.0, %v549
      %v551 = vpop.f32.mrb[0].mxu0
      %552 = vmatprep.mubr.f32.mxu0 0.0
      %553 = vmatmul.mubr.f32.gmra.mrb[0].mxu0 %v341
      %v554 = vpop.f32.mrb[0].mxu0
      %v555 = vadd.f32 0.0, %v554
      %v556 = vpop.f32.mrb[0].mxu0
      %557 = vmatprep.mubr.f32.mxu0 0.0
      %558 = vmatmul.mubr.f32.gmra.mrb[0].mxu0 %v344
      %v559 = vpop.f32.mrb[0].mxu0
      %v560 = vadd.f32 0.0, %v559
      %v561 = vpop.f32.mrb[0].mxu0
      %562 = vmatprep.mubr.f32.mxu0 0.0
      %563 = vmatmul.mubr.f32.gmra.mrb[0].mxu0 %v347
      %v564 = vpop.f32.mrb[0].mxu0
      %v565 = vadd.f32 0.0, %v564
      %v566 = vpop.f32.mrb[0].mxu0
      %567 = vmatprep.mubr.f32.mxu0 0.0
      %568 = vmatmul.mubr.f32.gmra.mrb[0].mxu0 %v350
      %v569 = vpop.f32.mrb[0].mxu0
      %v570 = vadd.f32 0.0, %v569
      %v571 = vpop.f32.mrb[0].mxu0
      %572 = vmatprep.mubr.f32.mxu0 0.0
      %573 = vmatmul.mubr.f32.gmra.mrb[0].mxu0 %v353
      %v574 = vpop.f32.mrb[0].mxu0
      %v575 = vadd.f32 0.0, %v574
      %v576 = vpop.f32.mrb[0].mxu0
      %577 = vmatprep.mubr.f32.mxu0 0.0
      %578 = vmatmul.mubr.f32.gmra.mrb[0].mxu0 %v356
      %v579 = vpop.f32.mrb[0].mxu0
      %v580 = vadd.f32 0.0, %v579
      %v581 = vpop.f32.mrb[0].mxu0
      %582 = vdwg.mxu0
      %v583 = vld [vmem:[%s2] sm:$0x1]
      %v585 = vlaneseq
      %v586 = vshrl.u32 %v585, 7
      %v587 = vsub.s32 0, %v586
      %v588 = vrot.slane %v583, %v587
      %v590 = vmul.f32 %v425, %v588
      %v591 = vmul.f32 %v430, %v588
      %v592 = vmul.f32 %v435, %v588
      %v593 = vmul.f32 %v440, %v588
      %v594 = vmul.f32 %v445, %v588
      %v595 = vmul.f32 %v450, %v588
      %v596 = vmul.f32 %v455, %v588
      %v597 = vmul.f32 %v460, %v588
      %v598 = vmul.f32 %v465, %v588
      %v599 = vmul.f32 %v470, %v588
      %v600 = vmul.f32 %v475, %v588
      %v601 = vmul.f32 %v480, %v588
      %v602 = vmul.f32 %v485, %v588
      %v603 = vmul.f32 %v490, %v588
      %v604 = vmul.f32 %v495, %v588
      %v605 = vmul.f32 %v500, %v588
      %v606 = vmul.f32 %v505, %v588
      %v607 = vmul.f32 %v510, %v588
      %v608 = vmul.f32 %v515, %v588
      %v609 = vmul.f32 %v520, %v588
      %v610 = vmul.f32 %v525, %v588
      %v611 = vmul.f32 %v530, %v588
      %v612 = vmul.f32 %v535, %v588
      %v613 = vmul.f32 %v540, %v588
      %v614 = vmul.f32 %v545, %v588
      %v615 = vmul.f32 %v550, %v588
      %v616 = vmul.f32 %v555, %v588
      %v617 = vmul.f32 %v560, %v588
      %v618 = vmul.f32 %v565, %v588
      %v619 = vmul.f32 %v570, %v588
      %v620 = vmul.f32 %v575, %v588
      %v621 = vmul.f32 %v580, %v588
      %v622 = vld [vmem:[%s3] sm:$0x1]
      %v624 = vlaneseq
      %v625 = vshrl.u32 %v624, 7
      %v626 = vsub.s32 0, %v625
      %v627 = vrot.slane %v622, %v626
      %v629 = vadd.f32 %v590, %v627
      %v630 = vadd.f32 %v591, %v627
      %v631 = vadd.f32 %v592, %v627
      %v632 = vadd.f32 %v593, %v627
      %v633 = vadd.f32 %v594, %v627
      %v634 = vadd.f32 %v595, %v627
      %v635 = vadd.f32 %v596, %v627
      %v636 = vadd.f32 %v597, %v627
      %v637 = vadd.f32 %v598, %v627
      %v638 = vadd.f32 %v599, %v627
      %v639 = vadd.f32 %v600, %v627
      %v640 = vadd.f32 %v601, %v627
      %v641 = vadd.f32 %v602, %v627
      %v642 = vadd.f32 %v603, %v627
      %v643 = vadd.f32 %v604, %v627
      %v644 = vadd.f32 %v605, %v627
      %v645 = vadd.f32 %v606, %v627
      %v646 = vadd.f32 %v607, %v627
      %v647 = vadd.f32 %v608, %v627
      %v648 = vadd.f32 %v609, %v627
      %v649 = vadd.f32 %v610, %v627
      %v650 = vadd.f32 %v611, %v627
      %v651 = vadd.f32 %v612, %v627
      %v652 = vadd.f32 %v613, %v627
      %v653 = vadd.f32 %v614, %v627
      %v654 = vadd.f32 %v615, %v627
      %v655 = vadd.f32 %v616, %v627
      %v656 = vadd.f32 %v617, %v627
      %v657 = vadd.f32 %v618, %v627
      %v658 = vadd.f32 %v619, %v627
      %v659 = vadd.f32 %v620, %v627
      %v660 = vadd.f32 %v621, %v627
      %vm661 = vcmp.ge.f32.partialorder %v629, 0.0
      %vm662 = vcmp.ge.f32.partialorder %v630, 0.0
      %vm663 = vcmp.ge.f32.partialorder %v631, 0.0
      %vm664 = vcmp.ge.f32.partialorder %v632, 0.0
      %vm665 = vcmp.ge.f32.partialorder %v633, 0.0
      %vm666 = vcmp.ge.f32.partialorder %v634, 0.0
      %vm667 = vcmp.ge.f32.partialorder %v635, 0.0
      %vm668 = vcmp.ge.f32.partialorder %v636, 0.0
      %vm669 = vcmp.ge.f32.partialorder %v637, 0.0
      %vm670 = vcmp.ge.f32.partialorder %v638, 0.0
      %vm671 = vcmp.ge.f32.partialorder %v639, 0.0
      %vm672 = vcmp.ge.f32.partialorder %v640, 0.0
      %vm673 = vcmp.ge.f32.partialorder %v641, 0.0
      %vm674 = vcmp.ge.f32.partialorder %v642, 0.0
      %vm675 = vcmp.ge.f32.partialorder %v643, 0.0
      %vm676 = vcmp.ge.f32.partialorder %v644, 0.0
      %vm677 = vcmp.ge.f32.partialorder %v645, 0.0
      %vm678 = vcmp.ge.f32.partialorder %v646, 0.0
      %vm679 = vcmp.ge.f32.partialorder %v647, 0.0
      %vm680 = vcmp.ge.f32.partialorder %v648, 0.0
      %vm681 = vcmp.ge.f32.partialorder %v649, 0.0
      %vm682 = vcmp.ge.f32.partialorder %v650, 0.0
      %vm683 = vcmp.ge.f32.partialorder %v651, 0.0
      %vm684 = vcmp.ge.f32.partialorder %v652, 0.0
      %vm685 = vcmp.ge.f32.partialorder %v653, 0.0
      %vm686 = vcmp.ge.f32.partialorder %v654, 0.0
      %vm687 = vcmp.ge.f32.partialorder %v655, 0.0
      %vm688 = vcmp.ge.f32.partialorder %v656, 0.0
      %vm689 = vcmp.ge.f32.partialorder %v657, 0.0
      %vm690 = vcmp.ge.f32.partialorder %v658, 0.0
      %vm691 = vcmp.ge.f32.partialorder %v659, 0.0
      %vm692 = vcmp.ge.f32.partialorder %v660, 0.0
      %v693 = vld [vmem:[%s4] sm:$0x1]
      %v695 = vlaneseq
      %v696 = vshrl.u32 %v695, 7
      %v697 = vsub.s32 0, %v696
      %v698 = vrot.slane %v693, %v697
      %v700 = vmul.f32 %v698, %v629
      %v701 = vmul.f32 %v698, %v630
      %v702 = vmul.f32 %v698, %v631
      %v703 = vmul.f32 %v698, %v632
      %v704 = vmul.f32 %v698, %v633
      %v705 = vmul.f32 %v698, %v634
      %v706 = vmul.f32 %v698, %v635
      %v707 = vmul.f32 %v698, %v636
      %v708 = vmul.f32 %v698, %v637
      %v709 = vmul.f32 %v698, %v638
      %v710 = vmul.f32 %v698, %v639
      %v711 = vmul.f32 %v698, %v640
      %v712 = vmul.f32 %v698, %v641
      %v713 = vmul.f32 %v698, %v642
      %v714 = vmul.f32 %v698, %v643
      %v715 = vmul.f32 %v698, %v644
      %v716 = vmul.f32 %v698, %v645
      %v717 = vmul.f32 %v698, %v646
      %v718 = vmul.f32 %v698, %v647
      %v719 = vmul.f32 %v698, %v648
      %v720 = vmul.f32 %v698, %v649
      %v721 = vmul.f32 %v698, %v650
      %v722 = vmul.f32 %v698, %v651
      %v723 = vmul.f32 %v698, %v652
      %v724 = vmul.f32 %v698, %v653
      %v725 = vmul.f32 %v698, %v654
      %v726 = vmul.f32 %v698, %v655
      %v727 = vmul.f32 %v698, %v656
      %v728 = vmul.f32 %v698, %v657
      %v729 = vmul.f32 %v698, %v658
      %v730 = vmul.f32 %v698, %v659
      %v731 = vmul.f32 %v698, %v660
      %v732 = vsel %vm661, %v629, %v700
      %v733 = vsel %vm662, %v630, %v701
      %v734 = vsel %vm663, %v631, %v702
      %v735 = vsel %vm664, %v632, %v703
      %v736 = vsel %vm665, %v633, %v704
      %v737 = vsel %vm666, %v634, %v705
      %v738 = vsel %vm667, %v635, %v706
      %v739 = vsel %vm668, %v636, %v707
      %v740 = vsel %vm669, %v637, %v708
      %v741 = vsel %vm670, %v638, %v709
      %v742 = vsel %vm671, %v639, %v710
      %v743 = vsel %vm672, %v640, %v711
      %v744 = vsel %vm673, %v641, %v712
      %v745 = vsel %vm674, %v642, %v713
      %v746 = vsel %vm675, %v643, %v714
      %v747 = vsel %vm676, %v644, %v715
      %v748 = vsel %vm677, %v645, %v716
      %v749 = vsel %vm678, %v646, %v717
      %v750 = vsel %vm679, %v647, %v718
      %v751 = vsel %vm680, %v648, %v719
      %v752 = vsel %vm681, %v649, %v720
      %v753 = vsel %vm682, %v650, %v721
      %v754 = vsel %vm683, %v651, %v722
      %v755 = vsel %vm684, %v652, %v723
      %v756 = vsel %vm685, %v653, %v724
      %v757 = vsel %vm686, %v654, %v725
      %v758 = vsel %vm687, %v655, %v726
      %v759 = vsel %vm688, %v656, %v727
      %v760 = vsel %vm689, %v657, %v728
      %v761 = vsel %vm690, %v658, %v729
      %v762 = vsel %vm691, %v659, %v730
      %v763 = vsel %vm692, %v660, %v731
      %764 = vst.msk [vmem:[%s224] sm:$0xff] %vm261, %v732
      %765 = vst.msk [vmem:[%s224 + $0x8] sm:$0xff] %vm261, %v733
      %766 = vst.msk [vmem:[%s224 + $0x10] sm:$0xff] %vm261, %v734
      %767 = vst.msk [vmem:[%s224 + $0x18] sm:$0xff] %vm261, %v735
      %768 = vst.msk [vmem:[%s224 + $0x20] sm:$0xff] %vm261, %v736
      %769 = vst.msk [vmem:[%s224 + $0x28] sm:$0xff] %vm261, %v737
      %770 = vst.msk [vmem:[%s224 + $0x30] sm:$0xff] %vm261, %v738
      %771 = vst.msk [vmem:[%s224 + $0x38] sm:$0xff] %vm261, %v739
      %772 = vst.msk [vmem:[%s224 + $0x40] sm:$0xff] %vm261, %v740
      %773 = vst.msk [vmem:[%s224 + $0x48] sm:$0xff] %vm261, %v741
      %774 = vst.msk [vmem:[%s224 + $0x50] sm:$0xff] %vm261, %v742
      %775 = vst.msk [vmem:[%s224 + $0x58] sm:$0xff] %vm261, %v743
      %776 = vst.msk [vmem:[%s224 + $0x60] sm:$0xff] %vm261, %v744
      %777 = vst.msk [vmem:[%s224 + $0x68] sm:$0xff] %vm261, %v745
      %778 = vst.msk [vmem:[%s224 + $0x70] sm:$0xff] %vm261, %v746
      %779 = vst.msk [vmem:[%s224 + $0x78] sm:$0xff] %vm261, %v747
      %780 = vst.msk [vmem:[%s224 + $0x80] sm:$0xff] %vm261, %v748
      %781 = vst.msk [vmem:[%s224 + $0x88] sm:$0xff] %vm261, %v749
      %782 = vst.msk [vmem:[%s224 + $0x90] sm:$0xff] %vm261, %v750
      %783 = vst.msk [vmem:[%s224 + $0x98] sm:$0xff] %vm261, %v751
      %784 = vst.msk [vmem:[%s224 + $0xa0] sm:$0xff] %vm261, %v752
      %785 = vst.msk [vmem:[%s224 + $0xa8] sm:$0xff] %vm261, %v753
      %786 = vst.msk [vmem:[%s224 + $0xb0] sm:$0xff] %vm261, %v754
      %787 = vst.msk [vmem:[%s224 + $0xb8] sm:$0xff] %vm261, %v755
      %788 = vst.msk [vmem:[%s224 + $0xc0] sm:$0xff] %vm261, %v756
      %789 = vst.msk [vmem:[%s224 + $0xc8] sm:$0xff] %vm261, %v757
      %790 = vst.msk [vmem:[%s224 + $0xd0] sm:$0xff] %vm261, %v758
      %791 = vst.msk [vmem:[%s224 + $0xd8] sm:$0xff] %vm261, %v759
      %792 = vst.msk [vmem:[%s224 + $0xe0] sm:$0xff] %vm261, %v760
      %793 = vst.msk [vmem:[%s224 + $0xe8] sm:$0xff] %vm261, %v761
      %794 = vst.msk [vmem:[%s224 + $0xf0] sm:$0xff] %vm261, %v762
      %795 = vst.msk [vmem:[%s224 + $0xf8] sm:$0xff] %vm261, %v763
      %p796 = scmp.lt.s32.totalorder %s16, 1
      %s797 = scalar_select %p796, %s16, 1
      %s798 = smul.addr %s797, 32
      %s799 = smul.addr %s798, 8
      %s800 = scalar_lea.vmem %s5, %s799
      // Predicated region
      $region41: #{tpu_custom_call.1} parent=39 // pred_check
        %p801 = pneg %p144
      $region42: #{tpu_custom_call.1} parent=39 // pred_check_branch
        %803 = sbr.rel (%p801) target = $region44
      $region43: #{tpu_custom_call.1} parent=39 // pred_region
        _
      $region44: #{tpu_custom_call.1} parent=39 // pred_fallthru
        _
    $region40: #{tpu_custom_call.1} parent=5 // pred_fallthru
      _
    %p804 = scmp.le.s32.totalorder 2, %s11
    // Predicated region
    $region45: #{tpu_custom_call.1} parent=5 // pred_check
      %p805 = pneg %p804
    $region46: #{tpu_custom_call.1} parent=5 // pred_check_branch
      %807 = sbr.rel (%p805) target = $region48
    $region47: #{tpu_custom_call.1} parent=5 // pred_region
      %s808 = ssub.s32 %s11, 2
      // Predicated region
      $region49: #{tpu_custom_call.1} parent=47 // pred_check
        %p809 = pneg %p150
      $region50: #{tpu_custom_call.1} parent=47 // pred_check_branch
        %811 = sbr.rel (%p809) target = $region52
      $region51: #{tpu_custom_call.1} parent=47 // pred_region
        %p812 = scmp.lt.s32.totalorder %s17, 1
        %s813 = scalar_select %p812, %s17, 1
        %s814 = smul.addr %s813, 32
        %s815 = smul.addr %s814, 8
        %s816 = scalar_lea.vmem %s5, %s815
      $region52: #{tpu_custom_call.1} parent=47 // pred_fallthru
        _
    $region48: #{tpu_custom_call.1} parent=5 // pred_fallthru
      _
  $region6: #{tpu_custom_call.1} parent=0 // loop_footer
    %s15 = sadd.s32 1, %s11
  $region7: #{tpu_custom_call.1} parent=0 // loop_footer_branch
    %10 = sbr.rel target = $region3
  $region8: #{tpu_custom_call.1} parent=0 // loop_exit
    _

</llo_original>
